<compile_context>
chip_gen: v7x
topology: tpu7x:2x2x1
jax: 0.10.0
libtpu: 0.0.40
codegen_flags: <defaults>
</compile_context>

<pallas_src>
import functools

import jax
import jax.numpy as jnp
from jax.experimental import pallas as pl
from jax.experimental.pallas import tpu as pltpu


def _round_up(x, m):
    return ((x + m - 1) // m) * m


def _cdiv(a, b):
    return -(-a // b)


def _vmem_limit_bytes():
    """Per-generation VMEM budget: ~75% of physical, capped at 100 MiB."""
    cap = 64 * 1024 * 1024  # conservative fallback (v7x-sized)
    try:
        info = pltpu.get_tpu_info()
        cap = getattr(info, "vmem_capacity_bytes", None) or cap
    except Exception:
        pass
    return int(min(cap * 3 // 4, 100 * 1024 * 1024))


def _make_sage_kernel(k_chunk):
    def sage_conv_kernel(adj_ref, h_src_ref, h_dst_ref, w_self_ref, w_neigh_ref,
                         b_ref, out_ref, acc_ref):
        """Grid = (row tile i [parallel], source/K tile k [arbitrary])."""
        k = pl.program_id(1)

        @pl.when(k == 0)
        def _():
            acc_ref[...] = jnp.zeros_like(acc_ref)

        tk = adj_ref.shape[1]
        # int8 adjacency is upcast and multiplied in k_chunk-wide sub-slices so
        # the f32 upcast temporary stays [tm, k_chunk] instead of [tm, tk]
        # (keeps VMEM/vreg pressure bounded as tiles grow).  Static Python loop:
        # trip count is small (tk / k_chunk).
        for start in range(0, tk, k_chunk):
            size = min(k_chunk, tk - start)
            adj_c = adj_ref[:, start:start + size].astype(jnp.float32)
            # h_src is [h | 1]: one matmul accumulates both the neighbor feature
            # sums and the in-degree (last column).
            acc_ref[...] += jnp.dot(adj_c, h_src_ref[start:start + size, :],
                                    preferred_element_type=jnp.float32)

        @pl.when(k == pl.num_programs(1) - 1)
        def _():
            f_in = h_dst_ref.shape[1] - 1
            acc = acc_ref[...]
            deg = acc[:, f_in:]                                   # [TM, 1] in-degree
            # Mean over in-neighbors; deg==0 -> 0 (DGL convention).  Exact recip
            # (approx=True EUP path is ~1e-4 rel error, borderline vs tolerance).
            h_n = acc[:, :f_in] * pl.reciprocal(jnp.maximum(deg, 1.0), approx=False)
            h_self = h_dst_ref[:, :f_in]                          # [TM, F_in]
            # Linear(concat([h, h_N])) == h @ W_self + h_N @ W_neigh + b.
            out = (jnp.dot(h_self, w_self_ref[...], preferred_element_type=jnp.float32)
                   + jnp.dot(h_n, w_neigh_ref[...], preferred_element_type=jnp.float32)
                   + b_ref[...])
            out_ref[...] = out.astype(out_ref.dtype)

    return sage_conv_kernel


def sage_conv(adj, h, weight, bias, *, tm=512, tk=2048, k_chunk=512):
    """adj: [N, N] with adj[dst, src] = 1 for edge src->dst; h: [N, F_in];
    weight: [F_out, 2*F_in] (PyTorch nn.Linear layout); bias: [F_out]."""
    n, f_in = h.shape
    f_out = weight.shape[0]
    assert weight.shape[1] == 2 * f_in
    assert adj.shape == (n, n)

    # ---- per-call tile clamping ---------------------------------------------
    # K / lane tile never larger than the 128-rounded graph.
    tk = min(tk, _round_up(n, 128))
    # Row tile: keep >= 2 row tiles when the graph allows it, so the "parallel"
    # row axis can actually be sharded across v7x's two TensorCores.
    tm = min(tm, max(128, _round_up(_cdiv(n, 2), 128)))
    # Upcast chunk: lane-tile aligned, never larger than tk.
    k_chunk = max(128, (min(k_chunk, tk) // 128) * 128)

    # ---- layout plumbing (cheap, once, in the wrapper) ----------------------
    f_out_p = _round_up(f_out, 128)          # lane-dense output stores
    n_rows_p = _round_up(n, tm)              # independent row / column padding
    n_cols_p = _round_up(n, tk)              # (no lcm inflation)
    f_aug = f_in + 1

    h_f32 = h.astype(jnp.float32)
    # [h | 1]: the ones column lets the aggregation matmul also produce in-degree.
    h_aug = jnp.concatenate([h_f32, jnp.ones((n, 1), jnp.float32)], axis=1)
    h_src = jnp.pad(h_aug, ((0, n_cols_p - n), (0, 0)))   # padded rows all-zero
    h_dst = jnp.pad(h_aug, ((0, n_rows_p - n), (0, 0)))

    # Adjacency streamed as int8 (0/1 exact) -> quarter of the f32 HBM traffic.
    adj_p = jnp.pad(adj.astype(jnp.int8),
                    ((0, n_rows_p - n), (0, n_cols_p - n)))

    # Split Linear weight into self / neighbor halves, transpose to [F_in, F_out],
    # zero-pad the output dim to f_out_p (pad contributes zeros, sliced off).
    w = weight.astype(jnp.float32)
    w_self = jnp.pad(w[:, :f_in].T, ((0, 0), (0, f_out_p - f_out)))
    w_neigh = jnp.pad(w[:, f_in:].T, ((0, 0), (0, f_out_p - f_out)))
    b2d = jnp.pad(bias.astype(jnp.float32).reshape(1, f_out),
                  ((0, 0), (0, f_out_p - f_out)))

    grid = (n_rows_p // tm, n_cols_p // tk)

    cost = pl.CostEstimate(
        flops=2 * n_rows_p * n_cols_p * f_aug + 4 * n_rows_p * f_in * f_out_p,
        transcendentals=0,
        bytes_accessed=(adj_p.size * 1                                   # int8 adjacency
                        + grid[0] * h_src.size * 4                       # src re-stream
                        + h_dst.size * 4
                        + (w_self.size + w_neigh.size + b2d.size) * 4
                        + n_rows_p * f_out_p * 4),                       # output
    )

    out_p = pl.pallas_call(
        _make_sage_kernel(k_chunk),
        out_shape=jax.ShapeDtypeStruct((n_rows_p, f_out_p), jnp.float32),
        grid_spec=pltpu.PrefetchScalarGridSpec(
            num_scalar_prefetch=0,
            grid=grid,
            in_specs=[
                pl.BlockSpec((tm, tk), lambda i, k: (i, k)),         # int8 adj tile
                pl.BlockSpec((tk, f_aug), lambda i, k: (k, 0)),      # [h|1] src tile
                pl.BlockSpec((tm, f_aug), lambda i, k: (i, 0)),      # [h|1] dst tile
                pl.BlockSpec((f_in, f_out_p), lambda i, k: (0, 0)),  # W_self (resident)
                pl.BlockSpec((f_in, f_out_p), lambda i, k: (0, 0)),  # W_neigh (resident)
                pl.BlockSpec((1, f_out_p), lambda i, k: (0, 0)),     # bias (resident)
            ],
            out_specs=pl.BlockSpec((tm, f_out_p), lambda i, k: (i, 0)),
            scratch_shapes=[pltpu.VMEM((tm, f_aug), jnp.float32)],   # agg accumulator
        ),
        compiler_params=pltpu.CompilerParams(
            dimension_semantics=("parallel", "arbitrary"),
            vmem_limit_bytes=_vmem_limit_bytes(),
        ),
        cost_estimate=cost,
    )(adj_p, h_src, h_dst, w_self, w_neigh, b2d)

    return out_p[:n, :f_out]


def sage_conv_ref(adj, h, weight, bias):
    """Pure-JAX reference mirroring the PyTorch/DGL forward."""
    deg = jnp.sum(adj, axis=-1, keepdims=True)
    h_n = (adj @ h) / jnp.maximum(deg, 1.0)
    total = jnp.concatenate([h, h_n], axis=1)
    return total @ weight.T + bias


if __name__ == "__main__":
    key = jax.random.PRNGKey(0)
    k_adj, k_h, k_w, k_b = jax.random.split(key, 4)

    N, F_IN, F_OUT = 256, 16, 32

    # Deterministic random graph (dense adjacency, adj[dst, src]).
    adj = jax.random.bernoulli(k_adj, p=0.15, shape=(N, N)).astype(jnp.float32)
    h = jax.random.normal(k_h, (N, F_IN), dtype=jnp.float32)

    # nn.Linear(2*F_IN, F_OUT) parameters, deterministic uniform init
    # (matches PyTorch's default U(-1/sqrt(fan_in), 1/sqrt(fan_in)) scheme).
    bound = 1.0 / jnp.sqrt(2.0 * F_IN)
    weight = jax.random.uniform(k_w, (F_OUT, 2 * F_IN), jnp.float32, -bound, bound)
    bias = jax.random.uniform(k_b, (F_OUT,), jnp.float32, -bound, bound)

    ref = sage_conv_ref(adj, h, weight, bias)

    # Exercise three static configurations of the same kernel:
    #   1. large-tile defaults (clamped for small N -> grid (2, 1))
    #   2. small symmetric tiles -> multi-step K accumulation (grid (2, 2))
    #   3. tk > k_chunk -> multi-chunk in-kernel upcast loop (grid (2, 1))
    configs = [
        dict(),
        dict(tm=128, tk=128, k_chunk=128),
        dict(tm=128, tk=256, k_chunk=128),
    ]
    for cfg in configs:
        out = jax.block_until_ready(sage_conv(adj, h, weight, bias, **cfg))
        assert out.shape == (N, F_OUT)
        err = float(jnp.max(jnp.abs(out - ref)))
        assert jnp.allclose(out, ref, atol=1e-4, rtol=1e-4), \
            f"cfg={cfg} max abs err {err}"

    print("KERNEL_OK")
</pallas_src>

<mosaic_0001>
module attributes {stable_mosaic.version = 11 : i64} {
  func.func @sage_conv_kernel(%arg0: i32, %arg1: i32, %arg2: memref<128x256xi8, #tpu.memory_space<vmem>>, %arg3: memref<256x17xf32, #tpu.memory_space<vmem>>, %arg4: memref<128x17xf32, #tpu.memory_space<vmem>>, %arg5: memref<16x128xf32, #tpu.memory_space<vmem>>, %arg6: memref<16x128xf32, #tpu.memory_space<vmem>>, %arg7: memref<1x128xf32, #tpu.memory_space<vmem>>, %arg8: memref<128x128xf32, #tpu.memory_space<vmem>>, %arg9: memref<128x17xf32, #tpu.memory_space<vmem>>) attributes {dimension_semantics = [#tpu.dimension_semantics<parallel>, #tpu.dimension_semantics<arbitrary>], iteration_bounds = array<i64: 2, 1>, scalar_prefetch = 0 : i64, scratch_operands = 1 : i64, tpu.core_type = #tpu.core_type<tc>, window_params = [{transform_indices = @transform_0, window_bounds = array<i64: 128, 256>}, {transform_indices = @transform_1, window_bounds = array<i64: 256, 17>}, {transform_indices = @transform_2, window_bounds = array<i64: 128, 17>}, {pipeline_mode = #tpu.pipeline_mode<synchronous>, transform_indices = @transform_3, window_bounds = array<i64: 16, 128>}, {pipeline_mode = #tpu.pipeline_mode<synchronous>, transform_indices = @transform_4, window_bounds = array<i64: 16, 128>}, {pipeline_mode = #tpu.pipeline_mode<synchronous>, transform_indices = @transform_5, window_bounds = array<i64: 1, 128>}, {transform_indices = @transform_6, window_bounds = array<i64: 128, 128>}]} {
    %c0_i32 = arith.constant 0 : i32
    %0 = arith.cmpi eq, %arg1, %c0_i32 : i32
    %1 = arith.extui %0 : i1 to i32
    %c0_i32_0 = arith.constant 0 : i32
    %2 = arith.cmpi ne, %1, %c0_i32_0 : i32
    scf.if %2 {
      %cst_10 = arith.constant 0.000000e+00 : f32
      %13 = vector.broadcast %cst_10 : f32 to vector<128x17xf32>
      %c0_11 = arith.constant 0 : index
      %c0_12 = arith.constant 0 : index
      %14 = vector.load %arg9[%c0_11, %c0_12] : memref<128x17xf32, #tpu.memory_space<vmem>>, vector<128x17xf32>
      tpu.vector_store %arg9[%c0_11, %c0_12], %13 {strides = array<i32>} : memref<128x17xf32, #tpu.memory_space<vmem>>, vector<128x17xf32>,
    } else {
    }
    %c0 = arith.constant 0 : index
    %c0_1 = arith.constant 0 : index
    %3 = vector.load %arg2[%c0, %c0_1] : memref<128x256xi8, #tpu.memory_space<vmem>>, vector<128x256xi8>
    %4 = arith.sitofp %3 : vector<128x256xi8> to vector<128x256xf32>
    %c0_2 = arith.constant 0 : index
    %c0_3 = arith.constant 0 : index
    %5 = vector.load %arg9[%c0_2, %c0_3] : memref<128x17xf32, #tpu.memory_space<vmem>>, vector<128x17xf32>
    %c0_4 = arith.constant 0 : index
    %c0_5 = arith.constant 0 : index
    %6 = vector.load %arg3[%c0_4, %c0_5] : memref<256x17xf32, #tpu.memory_space<vmem>>, vector<256x17xf32>
    %cst = arith.constant dense<0.000000e+00> : vector<128x17xf32>
    %7 = tpu.matmul %4, %6, %cst {dimension_numbers = #tpu.dot_dimension_numbers<[1], [0], [0], [1], [0, 0, 1, 1], [], []>} : vector<128x256xf32>, vector<256x17xf32>, vector<128x17xf32> -> vector<128x17xf32>
    %8 = arith.addf %5, %7 : vector<128x17xf32>
    %c0_6 = arith.constant 0 : index
    %c0_7 = arith.constant 0 : index
    %9 = vector.load %arg9[%c0_6, %c0_7] : memref<128x17xf32, #tpu.memory_space<vmem>>, vector<128x17xf32>
    tpu.vector_store %arg9[%c0_6, %c0_7], %8 {strides = array<i32>} : memref<128x17xf32, #tpu.memory_space<vmem>>, vector<128x17xf32>,
    %c0_i32_8 = arith.constant 0 : i32
    %10 = arith.cmpi eq, %arg1, %c0_i32_8 : i32
    %11 = arith.extui %10 : i1 to i32
    %c0_i32_9 = arith.constant 0 : i32
    %12 = arith.cmpi ne, %11, %c0_i32_9 : i32
    scf.if %12 {
      %c0_10 = arith.constant 0 : index
      %c0_11 = arith.constant 0 : index
      %13 = vector.load %arg9[%c0_10, %c0_11] : memref<128x17xf32, #tpu.memory_space<vmem>>, vector<128x17xf32>
      %14 = vector.extract_strided_slice %13 {offsets = [0, 16], sizes = [128, 1], strides = [1, 1]} : vector<128x17xf32> to vector<128x1xf32>
      %15 = vector.extract_strided_slice %13 {offsets = [0, 0], sizes = [128, 16], strides = [1, 1]} : vector<128x17xf32> to vector<128x16xf32>
      %cst_12 = arith.constant 1.000000e+00 : f32
      %16 = vector.broadcast %cst_12 : f32 to vector<128x1xf32>
      %17 = arith.maximumf %14, %16 : vector<128x1xf32>
      %18 = tpu.reciprocal %17 : vector<128x1xf32> -> vector<128x1xf32>
      %19 = vector.broadcast %18 : vector<128x1xf32> to vector<128x16xf32>
      %20 = arith.mulf %15, %19 : vector<128x16xf32>
      %c0_13 = arith.constant 0 : index
      %c0_14 = arith.constant 0 : index
      %21 = vector.load %arg4[%c0_13, %c0_14] : memref<128x17xf32, #tpu.memory_space<vmem>>, vector<128x16xf32>
      %c0_15 = arith.constant 0 : index
      %c0_16 = arith.constant 0 : index
      %22 = vector.load %arg5[%c0_15, %c0_16] : memref<16x128xf32, #tpu.memory_space<vmem>>, vector<16x128xf32>
      %cst_17 = arith.constant dense<0.000000e+00> : vector<128x128xf32>
      %23 = tpu.matmul %21, %22, %cst_17 {dimension_numbers = #tpu.dot_dimension_numbers<[1], [0], [0], [1], [0, 0, 1, 1], [], []>} : vector<128x16xf32>, vector<16x128xf32>, vector<128x128xf32> -> vector<128x128xf32>
      %c0_18 = arith.constant 0 : index
      %c0_19 = arith.constant 0 : index
      %24 = vector.load %arg6[%c0_18, %c0_19] : memref<16x128xf32, #tpu.memory_space<vmem>>, vector<16x128xf32>
      %cst_20 = arith.constant dense<0.000000e+00> : vector<128x128xf32>
      %25 = tpu.matmul %20, %24, %cst_20 {dimension_numbers = #tpu.dot_dimension_numbers<[1], [0], [0], [1], [0, 0, 1, 1], [], []>} : vector<128x16xf32>, vector<16x128xf32>, vector<128x128xf32> -> vector<128x128xf32>
      %26 = arith.addf %23, %25 : vector<128x128xf32>
      %c0_21 = arith.constant 0 : index
      %c0_22 = arith.constant 0 : index
      %27 = vector.load %arg7[%c0_21, %c0_22] : memref<1x128xf32, #tpu.memory_space<vmem>>, vector<1x128xf32>
      %28 = vector.broadcast %27 : vector<1x128xf32> to vector<128x128xf32>
      %29 = arith.addf %26, %28 : vector<128x128xf32>
      %c0_23 = arith.constant 0 : index
      %c0_24 = arith.constant 0 : index
      %30 = vector.load %arg8[%c0_23, %c0_24] : memref<128x128xf32, #tpu.memory_space<vmem>>, vector<128x128xf32>
      tpu.vector_store %arg8[%c0_23, %c0_24], %29 {strides = array<i32>} : memref<128x128xf32, #tpu.memory_space<vmem>>, vector<128x128xf32>,
    } else {
    }
    return
  }
  func.func @transform_0(%arg0: i32, %arg1: i32) -> (i32, i32) {
    %c0_i32 = arith.constant 0 : i32
    return %arg0, %arg1 : i32, i32
  }
  func.func @transform_1(%arg0: i32, %arg1: i32) -> (i32, i32) {
    %c0_i32 = arith.constant 0 : i32
    %c0_i32_0 = arith.constant 0 : i32
    return %arg1, %c0_i32 : i32, i32
  }
  func.func @transform_2(%arg0: i32, %arg1: i32) -> (i32, i32) {
    %c0_i32 = arith.constant 0 : i32
    %c0_i32_0 = arith.constant 0 : i32
    return %arg0, %c0_i32 : i32, i32
  }
  func.func @transform_3(%arg0: i32, %arg1: i32) -> (i32, i32) {
    %c0_i32 = arith.constant 0 : i32
    %c0_i32_0 = arith.constant 0 : i32
    %c0_i32_1 = arith.constant 0 : i32
    return %c0_i32, %c0_i32_0 : i32, i32
  }
  func.func @transform_4(%arg0: i32, %arg1: i32) -> (i32, i32) {
    %c0_i32 = arith.constant 0 : i32
    %c0_i32_0 = arith.constant 0 : i32
    %c0_i32_1 = arith.constant 0 : i32
    return %c0_i32, %c0_i32_0 : i32, i32
  }
  func.func @transform_5(%arg0: i32, %arg1: i32) -> (i32, i32) {
    %c0_i32 = arith.constant 0 : i32
    %c0_i32_0 = arith.constant 0 : i32
    %c0_i32_1 = arith.constant 0 : i32
    return %c0_i32, %c0_i32_0 : i32, i32
  }
  func.func @transform_6(%arg0: i32, %arg1: i32) -> (i32, i32) {
    %c0_i32 = arith.constant 0 : i32
    %c0_i32_0 = arith.constant 0 : i32
    return %arg0, %c0_i32 : i32, i32
  }
}

</mosaic_0001>

<llo_original>
// kernel: tpu_custom_call.1
$region0: #{tpu_custom_call.1}
  #allocation0 [shape = 'u32[]', space=smem, size = 0x4, offset = 0x4, fixed_abs, tag = 'smem constant byte address 0x4 - core index']
  #allocation1 [shape = 'u32[144,128]{1,0:T(1,128)}', space=vmem, size = 0x12000, scoped, tag = 'internal scratch']
  #allocation2 [shape = 'f32[128,17]{1,0:T(8,128)}', space=vmem, size = 0x10000, scoped, tag = 'scratch operand']
  %s0 = inlined_call_operand.vmem [shape: s8[256,256], index: 0, kind: input, shape index: {}]
  %s1 = inlined_call_operand.vmem [shape: f32[256,17], index: 1, kind: input, shape index: {}]
  %s2 = inlined_call_operand.vmem [shape: f32[256,17], index: 2, kind: input, shape index: {}]
  %s3 = inlined_call_operand.vmem [shape: f32[16,128], index: 3, kind: input, shape index: {}]
  %s4 = inlined_call_operand.vmem [shape: f32[16,128], index: 4, kind: input, shape index: {}]
  %s5 = inlined_call_operand.vmem [shape: f32[1,128], index: 5, kind: input, shape index: {}]
  %s6 = inlined_call_operand.hbm [shape: f32[256,128], index: 6, kind: output, shape index: {}]
  %s7 = sld [smem:[#allocation0]]
  $region65: #{tpu_custom_call.1} parent=0
    _
  %s9 = ssub.s32 1, %s7
  %s10 = scalar_select 0, %s9, %s7
  $region1: #{tpu_custom_call.1} parent=0
    #allocation3 [shape = 'u8[131072]{0}', space=vmem, size = 0x20000, scoped, tag = 'output window, operand 0']
    #allocation4 [shape = 's32[2]{0}', space=sflag, size = 0x8, scoped, tag = 'scoped memory for tpu_custom_call.1']
    %11 = vsyncpa [#allocation4], 0
    %s12 = scalar_lea.sflag [#allocation4], 1
    %13 = vsyncpa %s12, 0
    loop: start=0, step=1, limit=4
    $region2: #{tpu_custom_call.1} parent=1 // loop_pre_header
      _
    $region3: #{tpu_custom_call.1} parent=1 // loop_header
      %s15 = sphi 0, %s19
      %p16 = scmp.ge.s32.totalorder %s15, 4
      %s22 = sphi 0, %s34
      %s23 = sphi 0, %s30
      %s24 = sphi 0, %s22
      %s25 = sphi 0, %s23
      %s26 = sphi 0, %s24
      %s27 = sphi 0, %s25
      %s39 = sphi 0, %s41
      %s42 = sphi 0, %s39
      %s43 = sphi 0, %s42
      %s59 = sphi 0, %s43
      %s65 = sphi 0, %s67
      %s68 = sphi 0, %s65
      %s69 = sphi 0, %s68
      %s85 = sphi 0, %s69
      %s91 = sphi 0, %s93
      %s94 = sphi 0, %s91
      %s95 = sphi 0, %s94
      %s111 = sphi 0, %s95
      %s115 = sphi 0, %s115
      %s117 = sphi 0, %s115
      %s118 = sphi 0, %s117
      %s132 = sphi 0, %s118
      %s136 = sphi 0, %s136
      %s138 = sphi 0, %s136
      %s139 = sphi 0, %s138
      %s153 = sphi 0, %s139
      %s157 = sphi 0, %s157
      %s159 = sphi 0, %s157
      %s160 = sphi 0, %s159
      %s174 = sphi 0, %s160
      %s180 = sphi 0, %s182
      %s183 = sphi 0, %s180
      %s184 = sphi 0, %s183
      %s200 = sphi 0, %s184
    $region4: #{tpu_custom_call.1} parent=1 // loop_header_branch
      %18 = sbr.rel (%p16) target = $region8
    $region5: #{tpu_custom_call.1} parent=1 // loop_body
      %s20 = ssub.s32 %s15, 1
      %s21 = ssub.s32 %s15, 2
      %s28 = sadd.s32 1, %s23
      %p29 = scmp.ge.s32.totalorder %s28, 1
      %s30 = scalar_select %p29, 0, %s28
      %s31 = sadd.s32 1, %s22
      %s32 = scalar_select %p29, %s31, %s22
      %p33 = scmp.ge.s32.totalorder %s32, 2
      %s34 = scalar_select %p33, 0, %s32
      %s35 = ssub.s32 %s22, %s34
      %s36 = ssub.s32 %s23, %s30
      %s37 = sor.u32 %s35, %s36
      %p38 = scmp.eq.s32.totalorder %s37, 0
      %s40 = sadd.s32 %s39, 1
      %s41 = scalar_select %p38, %s39, %s40
      %p44 = pneg %p38
      %p45 = scmp.eq.s32.totalorder %s15, 1
      %p46 = por %p44, %p45
      %p47 = scmp.ne.s32.totalorder %s39, %s42
      %p48 = scmp.eq.s32.totalorder %s15, 0
      %p49 = por %p47, %p48
      %p50 = scmp.ne.s32.totalorder %s39, %s42
      %p51 = scmp.eq.s32.totalorder %s20, 1
      %p52 = por %p50, %p51
      %p53 = scmp.ne.s32.totalorder %s42, %s43
      %p54 = scmp.eq.s32.totalorder %s20, 0
      %p55 = por %p53, %p54
      %p56 = scmp.ne.s32.totalorder %s42, %s43
      %p57 = scmp.eq.s32.totalorder %s21, 1
      %p58 = por %p56, %p57
      %p60 = scmp.ne.s32.totalorder %s43, %s59
      %p61 = scmp.eq.s32.totalorder %s21, 0
      %p62 = por %p60, %p61
      %s63 = ssub.s32 %s23, %s30
      %p64 = scmp.eq.s32.totalorder %s63, 0
      %s66 = sadd.s32 %s65, 1
      %s67 = scalar_select %p64, %s65, %s66
      %p70 = pneg %p64
      %p71 = scmp.eq.s32.totalorder %s15, 1
      %p72 = por %p70, %p71
      %p73 = scmp.ne.s32.totalorder %s65, %s68
      %p74 = scmp.eq.s32.totalorder %s15, 0
      %p75 = por %p73, %p74
      %p76 = scmp.ne.s32.totalorder %s65, %s68
      %p77 = scmp.eq.s32.totalorder %s20, 1
      %p78 = por %p76, %p77
      %p79 = scmp.ne.s32.totalorder %s68, %s69
      %p80 = scmp.eq.s32.totalorder %s20, 0
      %p81 = por %p79, %p80
      %p82 = scmp.ne.s32.totalorder %s68, %s69
      %p83 = scmp.eq.s32.totalorder %s21, 1
      %p84 = por %p82, %p83
      %p86 = scmp.ne.s32.totalorder %s69, %s85
      %p87 = scmp.eq.s32.totalorder %s21, 0
      %p88 = por %p86, %p87
      %s89 = ssub.s32 %s22, %s34
      %p90 = scmp.eq.s32.totalorder %s89, 0
      %s92 = sadd.s32 %s91, 1
      %s93 = scalar_select %p90, %s91, %s92
      %p96 = pneg %p90
      %p97 = scmp.eq.s32.totalorder %s15, 1
      %p98 = por %p96, %p97
      %p99 = scmp.ne.s32.totalorder %s91, %s94
      %p100 = scmp.eq.s32.totalorder %s15, 0
      %p101 = por %p99, %p100
      %p102 = scmp.ne.s32.totalorder %s91, %s94
      %p103 = scmp.eq.s32.totalorder %s20, 1
      %p104 = por %p102, %p103
      %p105 = scmp.ne.s32.totalorder %s94, %s95
      %p106 = scmp.eq.s32.totalorder %s20, 0
      %p107 = por %p105, %p106
      %p108 = scmp.ne.s32.totalorder %s94, %s95
      %p109 = scmp.eq.s32.totalorder %s21, 1
      %p110 = por %p108, %p109
      %p112 = scmp.ne.s32.totalorder %s95, %s111
      %p113 = scmp.eq.s32.totalorder %s21, 0
      %p114 = por %p112, %p113
      %s116 = sadd.s32 %s115, 1
      %p119 = scmp.eq.s32.totalorder %s15, 1
      %p120 = scmp.ne.s32.totalorder %s115, %s117
      %p121 = scmp.eq.s32.totalorder %s15, 0
      %p122 = por %p120, %p121
      %p123 = scmp.ne.s32.totalorder %s115, %s117
      %p124 = scmp.eq.s32.totalorder %s20, 1
      %p125 = por %p123, %p124
      %p126 = scmp.ne.s32.totalorder %s117, %s118
      %p127 = scmp.eq.s32.totalorder %s20, 0
      %p128 = por %p126, %p127
      %p129 = scmp.ne.s32.totalorder %s117, %s118
      %p130 = scmp.eq.s32.totalorder %s21, 1
      %p131 = por %p129, %p130
      %p133 = scmp.ne.s32.totalorder %s118, %s132
      %p134 = scmp.eq.s32.totalorder %s21, 0
      %p135 = por %p133, %p134
      %s137 = sadd.s32 %s136, 1
      %p140 = scmp.eq.s32.totalorder %s15, 1
      %p141 = scmp.ne.s32.totalorder %s136, %s138
      %p142 = scmp.eq.s32.totalorder %s15, 0
      %p143 = por %p141, %p142
      %p144 = scmp.ne.s32.totalorder %s136, %s138
      %p145 = scmp.eq.s32.totalorder %s20, 1
      %p146 = por %p144, %p145
      %p147 = scmp.ne.s32.totalorder %s138, %s139
      %p148 = scmp.eq.s32.totalorder %s20, 0
      %p149 = por %p147, %p148
      %p150 = scmp.ne.s32.totalorder %s138, %s139
      %p151 = scmp.eq.s32.totalorder %s21, 1
      %p152 = por %p150, %p151
      %p154 = scmp.ne.s32.totalorder %s139, %s153
      %p155 = scmp.eq.s32.totalorder %s21, 0
      %p156 = por %p154, %p155
      %s158 = sadd.s32 %s157, 1
      %p161 = scmp.eq.s32.totalorder %s15, 1
      %p162 = scmp.ne.s32.totalorder %s157, %s159
      %p163 = scmp.eq.s32.totalorder %s15, 0
      %p164 = por %p162, %p163
      %p165 = scmp.ne.s32.totalorder %s157, %s159
      %p166 = scmp.eq.s32.totalorder %s20, 1
      %p167 = por %p165, %p166
      %p168 = scmp.ne.s32.totalorder %s159, %s160
      %p169 = scmp.eq.s32.totalorder %s20, 0
      %p170 = por %p168, %p169
      %p171 = scmp.ne.s32.totalorder %s159, %s160
      %p172 = scmp.eq.s32.totalorder %s21, 1
      %p173 = por %p171, %p172
      %p175 = scmp.ne.s32.totalorder %s160, %s174
      %p176 = scmp.eq.s32.totalorder %s21, 0
      %p177 = por %p175, %p176
      %s178 = ssub.s32 %s22, %s34
      %p179 = scmp.eq.s32.totalorder %s178, 0
      %s181 = sadd.s32 %s180, 1
      %s182 = scalar_select %p179, %s180, %s181
      %p185 = pneg %p179
      %p186 = scmp.eq.s32.totalorder %s15, 1
      %p187 = por %p185, %p186
      %p188 = scmp.ne.s32.totalorder %s180, %s183
      %p189 = scmp.eq.s32.totalorder %s15, 0
      %p190 = por %p188, %p189
      %p191 = scmp.ne.s32.totalorder %s180, %s183
      %p192 = scmp.eq.s32.totalorder %s20, 1
      %p193 = por %p191, %p192
      %p194 = scmp.ne.s32.totalorder %s183, %s184
      %p195 = scmp.eq.s32.totalorder %s20, 0
      %p196 = por %p194, %p195
      %p197 = scmp.ne.s32.totalorder %s183, %s184
      %p198 = scmp.eq.s32.totalorder %s21, 1
      %p199 = por %p197, %p198
      %p201 = scmp.ne.s32.totalorder %s184, %s200
      %p202 = scmp.eq.s32.totalorder %s21, 0
      %p203 = por %p201, %p202
      %p204 = scmp.le.s32.totalorder 1, %s15
      %p205 = scmp.lt.s32.totalorder %s15, 3
      %p206 = pnand %p204, %p205
      %p207 = pneg %p206
      // Predicated region
      $region9: #{tpu_custom_call.1} parent=5 // pred_check
        _
      $region10: #{tpu_custom_call.1} parent=5 // pred_check_branch
        %209 = sbr.rel (%p206) target = $region12
      $region11: #{tpu_custom_call.1} parent=5 // pred_region
        %s210 = ssub.s32 %s15, 1
        // Predicated region
        $region13: #{tpu_custom_call.1} parent=11 // pred_check
          %p211 = pneg %p81
        $region14: #{tpu_custom_call.1} parent=11 // pred_check_branch
          %213 = sbr.rel (%p211) target = $region16
        $region15: #{tpu_custom_call.1} parent=11 // pred_region
          %s214 = smul.u32 32, %s25
          %p215 = scmp.lt.s32.totalorder %s214, 31
          %s216 = scalar_select %p215, %s214, 31
          %s217 = smul.addr %s216, 8
          %s218 = scalar_lea.vmem %s1, %s217
          %s219 = smul.u32 32, %s25
        $region16: #{tpu_custom_call.1} parent=11 // pred_fallthru
          _
        // Predicated region
        $region17: #{tpu_custom_call.1} parent=11 // pred_check
          %p220 = pneg %p128
        $region18: #{tpu_custom_call.1} parent=11 // pred_check_branch
          %222 = sbr.rel (%p220) target = $region20
        $region19: #{tpu_custom_call.1} parent=11 // pred_region
          _
        $region20: #{tpu_custom_call.1} parent=11 // pred_fallthru
          _
        // Predicated region
        $region21: #{tpu_custom_call.1} parent=11 // pred_check
          %p223 = pneg %p149
        $region22: #{tpu_custom_call.1} parent=11 // pred_check_branch
          %225 = sbr.rel (%p223) target = $region24
        $region23: #{tpu_custom_call.1} parent=11 // pred_region
          _
        $region24: #{tpu_custom_call.1} parent=11 // pred_fallthru
          _
        // Predicated region
        $region25: #{tpu_custom_call.1} parent=11 // pred_check
          %p226 = pneg %p170
        $region26: #{tpu_custom_call.1} parent=11 // pred_check_branch
          %228 = sbr.rel (%p226) target = $region28
        $region27: #{tpu_custom_call.1} parent=11 // pred_region
          _
        $region28: #{tpu_custom_call.1} parent=11 // pred_fallthru
          _
      $region12: #{tpu_custom_call.1} parent=5 // pred_fallthru
        _
      %p229 = scmp.lt.s32.totalorder %s15, 2
      // Predicated region
      $region29: #{tpu_custom_call.1} parent=5 // pred_check
        %p230 = pneg %p229
      $region30: #{tpu_custom_call.1} parent=5 // pred_check_branch
        %232 = sbr.rel (%p230) target = $region32
      $region31: #{tpu_custom_call.1} parent=5 // pred_region
        // Predicated region
        $region33: #{tpu_custom_call.1} parent=31 // pred_check
          %p233 = pneg %p49
        $region34: #{tpu_custom_call.1} parent=31 // pred_check_branch
          %235 = sbr.rel (%p233) target = $region36
        $region35: #{tpu_custom_call.1} parent=31 // pred_region
          %s236 = smul.u32 4, %s22
          %s237 = smul.u32 2, %s23
          %p238 = scmp.lt.s32.totalorder %s236, 7
          %s239 = scalar_select %p238, %s236, 7
          %p240 = scmp.lt.s32.totalorder %s237, 1
          %s241 = scalar_select %p240, %s237, 1
          %s242 = smul.addr %s239, 2
          %s243 = sadd.s32 %s241, %s242
          %s244 = smul.addr %s243, 8
          %s245 = scalar_lea.vmem %s0, %s244
          %s246 = smul.u32 4, %s22
          %s247 = smul.u32 2, %s23
        $region36: #{tpu_custom_call.1} parent=31 // pred_fallthru
          _
        // Predicated region
        $region37: #{tpu_custom_call.1} parent=31 // pred_check
          %p248 = pneg %p101
        $region38: #{tpu_custom_call.1} parent=31 // pred_check_branch
          %250 = sbr.rel (%p248) target = $region40
        $region39: #{tpu_custom_call.1} parent=31 // pred_region
          %s251 = smul.u32 16, %s22
          %p252 = scmp.lt.s32.totalorder %s251, 31
          %s253 = scalar_select %p252, %s251, 31
          %s254 = smul.addr %s253, 8
          %s255 = scalar_lea.vmem %s2, %s254
          %s256 = smul.u32 16, %s22
        $region40: #{tpu_custom_call.1} parent=31 // pred_fallthru
          _
      $region32: #{tpu_custom_call.1} parent=5 // pred_fallthru
        _
      %p257 = scmp.le.s32.totalorder 1, %s15
      %p258 = scmp.lt.s32.totalorder %s15, 3
      %p259 = pnand %p257, %p258
      %p260 = pneg %p259
      // Predicated region
      $region41: #{tpu_custom_call.1} parent=5 // pred_check
        _
      $region42: #{tpu_custom_call.1} parent=5 // pred_check_branch
        %262 = sbr.rel (%p259) target = $region44
      $region43: #{tpu_custom_call.1} parent=5 // pred_region
        %s263 = ssub.s32 %s15, 1
        %s264 = smul.u32 4, %s24
        %s265 = smul.u32 2, %s25
        %p266 = scmp.lt.s32.totalorder %s264, 7
        %s267 = scalar_select %p266, %s264, 7
        %p268 = scmp.lt.s32.totalorder %s265, 1
        %s269 = scalar_select %p268, %s265, 1
        %s270 = smul.addr %s267, 2
        %s271 = sadd.s32 %s269, %s270
        %s272 = smul.addr %s271, 8
        %s273 = scalar_lea.vmem %s0, %s272
        %p274 = pneg %p55
        %p275 = pneg %p52
        %s276 = smul.u32 32, %s25
        %p277 = scmp.lt.s32.totalorder %s276, 31
        %s278 = scalar_select %p277, %s276, 31
        %s279 = smul.addr %s278, 8
        %s280 = scalar_lea.vmem %s1, %s279
        %p281 = pneg %p81
        %p282 = pneg %p78
        %s283 = smul.u32 16, %s24
        %p284 = scmp.lt.s32.totalorder %s283, 31
        %s285 = scalar_select %p284, %s283, 31
        %s286 = smul.addr %s285, 8
        %s287 = scalar_lea.vmem %s2, %s286
        %p288 = pneg %p107
        %p289 = pneg %p104
        %p290 = pneg %p128
        %p291 = pneg %p125
        %p292 = pneg %p149
        %p293 = pneg %p146
        %p294 = pneg %p170
        %p295 = pneg %p167
        %p296 = pneg %p196
        %p297 = pneg %p193
        %s298 = sand.u32 %s183, 1
        %s299 = scalar_lea.sflag [#allocation4], %s298
        %s300 = sand.u32 %s183, 1
        %s301 = smul.addr %s300, 128
        %s302 = scalar_lea.vmem [#allocation3], %s301
        %s303 = smul.u32 4, %s24
        %s304 = smul.u32 2, %s25
        %p305 = scmp.lt.s32.totalorder %s303, 7
        %s306 = scalar_select %p305, %s303, 7
        %p307 = scmp.lt.s32.totalorder %s304, 1
        %s308 = scalar_select %p307, %s304, 1
        %s309 = smul.addr %s306, 2
        %s310 = sadd.s32 %s308, %s309
        %s311 = smul.addr %s310, 8
        %s312 = scalar_lea.vmem %s0, %s311
        %s313 = smul.u32 4, %s24
        %s314 = smul.u32 2, %s25
        %s315 = smul.u32 32, %s25
        %p316 = scmp.lt.s32.totalorder %s315, 31
        %s317 = scalar_select %p316, %s315, 31
        %s318 = smul.addr %s317, 8
        %s319 = scalar_lea.vmem %s1, %s318
        %s320 = smul.u32 32, %s25
        %s321 = smul.u32 16, %s24
        %p322 = scmp.lt.s32.totalorder %s321, 31
        %s323 = scalar_select %p322, %s321, 31
        %s324 = smul.addr %s323, 8
        %s325 = scalar_lea.vmem %s2, %s324
        %s326 = smul.u32 16, %s24
        %s327 = smul.u32 16, %s24
        %p328 = scmp.eq.s32.totalorder %s25, 0
        // Predicated region
        $region45: #{tpu_custom_call.1} parent=43 // pred_check
          %p329 = pneg %p328
        $region46: #{tpu_custom_call.1} parent=43 // pred_check_branch
          %331 = sbr.rel (%p329) target = $region48
        $region47: #{tpu_custom_call.1} parent=43 // pred_region
          %vm332 = vcmask 138240
          %333 = vst.msk [vmem:[#allocation2] sm:$0xff] %vm332, 0.0
          %334 = vst.msk [vmem:[#allocation2 + $0x8] sm:$0xff] %vm332, 0.0
          %335 = vst.msk [vmem:[#allocation2 + $0x10] sm:$0xff] %vm332, 0.0
          %336 = vst.msk [vmem:[#allocation2 + $0x18] sm:$0xff] %vm332, 0.0
          %337 = vst.msk [vmem:[#allocation2 + $0x20] sm:$0xff] %vm332, 0.0
          %338 = vst.msk [vmem:[#allocation2 + $0x28] sm:$0xff] %vm332, 0.0
          %339 = vst.msk [vmem:[#allocation2 + $0x30] sm:$0xff] %vm332, 0.0
          %340 = vst.msk [vmem:[#allocation2 + $0x38] sm:$0xff] %vm332, 0.0
          %341 = vst.msk [vmem:[#allocation2 + $0x40] sm:$0xff] %vm332, 0.0
          %342 = vst.msk [vmem:[#allocation2 + $0x48] sm:$0xff] %vm332, 0.0
          %343 = vst.msk [vmem:[#allocation2 + $0x50] sm:$0xff] %vm332, 0.0
          %344 = vst.msk [vmem:[#allocation2 + $0x58] sm:$0xff] %vm332, 0.0
          %345 = vst.msk [vmem:[#allocation2 + $0x60] sm:$0xff] %vm332, 0.0
          %346 = vst.msk [vmem:[#allocation2 + $0x68] sm:$0xff] %vm332, 0.0
          %347 = vst.msk [vmem:[#allocation2 + $0x70] sm:$0xff] %vm332, 0.0
          %348 = vst.msk [vmem:[#allocation2 + $0x78] sm:$0xff] %vm332, 0.0
        $region48: #{tpu_custom_call.1} parent=43 // pred_fallthru
          _
        %v349 = vld [vmem:[%s312] sm:$0xff]
        %v350 = vld [vmem:[%s312 + $0x8] sm:$0xff]
        %v351 = vld [vmem:[%s312 + $0x10] sm:$0xff]
        %v352 = vld [vmem:[%s312 + $0x18] sm:$0xff]
        %v353 = vld [vmem:[%s312 + $0x20] sm:$0xff]
        %v354 = vld [vmem:[%s312 + $0x28] sm:$0xff]
        %v355 = vld [vmem:[%s312 + $0x30] sm:$0xff]
        %v356 = vld [vmem:[%s312 + $0x38] sm:$0xff]
        %v357 = vunpack.c.0.s8 %v349
        %v358 = vunpack.c.0.s8 %v350
        %v359 = vunpack.c.1.s8 %v349
        %v360 = vunpack.c.1.s8 %v350
        %v361 = vunpack.c.2.s8 %v349
        %v362 = vunpack.c.2.s8 %v350
        %v363 = vunpack.c.3.s8 %v349
        %v364 = vunpack.c.3.s8 %v350
        %v365 = vunpack.c.0.s8 %v351
        %v366 = vunpack.c.0.s8 %v352
        %v367 = vunpack.c.1.s8 %v351
        %v368 = vunpack.c.1.s8 %v352
        %v369 = vunpack.c.2.s8 %v351
        %v370 = vunpack.c.2.s8 %v352
        %v371 = vunpack.c.3.s8 %v351
        %v372 = vunpack.c.3.s8 %v352
        %v373 = vunpack.c.0.s8 %v353
        %v374 = vunpack.c.0.s8 %v354
        %v375 = vunpack.c.1.s8 %v353
        %v376 = vunpack.c.1.s8 %v354
        %v377 = vunpack.c.2.s8 %v353
        %v378 = vunpack.c.2.s8 %v354
        %v379 = vunpack.c.3.s8 %v353
        %v380 = vunpack.c.3.s8 %v354
        %v381 = vunpack.c.0.s8 %v355
        %v382 = vunpack.c.0.s8 %v356
        %v383 = vunpack.c.1.s8 %v355
        %v384 = vunpack.c.1.s8 %v356
        %v385 = vunpack.c.2.s8 %v355
        %v386 = vunpack.c.2.s8 %v356
        %v387 = vunpack.c.3.s8 %v355
        %v388 = vunpack.c.3.s8 %v356
        %v389 = vcvt.s32.f32 %v357
        %v390 = vcvt.s32.f32 %v358
        %v391 = vcvt.s32.f32 %v359
        %v392 = vcvt.s32.f32 %v360
        %v393 = vcvt.s32.f32 %v361
        %v394 = vcvt.s32.f32 %v362
        %v395 = vcvt.s32.f32 %v363
        %v396 = vcvt.s32.f32 %v364
        %v397 = vcvt.s32.f32 %v365
        %v398 = vcvt.s32.f32 %v366
        %v399 = vcvt.s32.f32 %v367
        %v400 = vcvt.s32.f32 %v368
        %v401 = vcvt.s32.f32 %v369
        %v402 = vcvt.s32.f32 %v370
        %v403 = vcvt.s32.f32 %v371
        %v404 = vcvt.s32.f32 %v372
        %v405 = vcvt.s32.f32 %v373
        %v406 = vcvt.s32.f32 %v374
        %v407 = vcvt.s32.f32 %v375
        %v408 = vcvt.s32.f32 %v376
        %v409 = vcvt.s32.f32 %v377
        %v410 = vcvt.s32.f32 %v378
        %v411 = vcvt.s32.f32 %v379
        %v412 = vcvt.s32.f32 %v380
        %v413 = vcvt.s32.f32 %v381
        %v414 = vcvt.s32.f32 %v382
        %v415 = vcvt.s32.f32 %v383
        %v416 = vcvt.s32.f32 %v384
        %v417 = vcvt.s32.f32 %v385
        %v418 = vcvt.s32.f32 %v386
        %v419 = vcvt.s32.f32 %v387
        %v420 = vcvt.s32.f32 %v388
        %v421 = vld [vmem:[#allocation2] sm:$0xff]
        %v422 = vld [vmem:[#allocation2 + $0x8] sm:$0xff]
        %v423 = vld [vmem:[#allocation2 + $0x10] sm:$0xff]
        %v424 = vld [vmem:[#allocation2 + $0x18] sm:$0xff]
        %v425 = vld [vmem:[#allocation2 + $0x20] sm:$0xff]
        %v426 = vld [vmem:[#allocation2 + $0x28] sm:$0xff]
        %v427 = vld [vmem:[#allocation2 + $0x30] sm:$0xff]
        %v428 = vld [vmem:[#allocation2 + $0x38] sm:$0xff]
        %v429 = vld [vmem:[#allocation2 + $0x40] sm:$0xff]
        %v430 = vld [vmem:[#allocation2 + $0x48] sm:$0xff]
        %v431 = vld [vmem:[#allocation2 + $0x50] sm:$0xff]
        %v432 = vld [vmem:[#allocation2 + $0x58] sm:$0xff]
        %v433 = vld [vmem:[#allocation2 + $0x60] sm:$0xff]
        %v434 = vld [vmem:[#allocation2 + $0x68] sm:$0xff]
        %v435 = vld [vmem:[#allocation2 + $0x70] sm:$0xff]
        %v436 = vld [vmem:[#allocation2 + $0x78] sm:$0xff]
        %v437 = vld [vmem:[%s319] sm:$0xff]
        %v438 = vld [vmem:[%s319 + $0x8] sm:$0xff]
        %v439 = vld [vmem:[%s319 + $0x10] sm:$0xff]
        %v440 = vld [vmem:[%s319 + $0x18] sm:$0xff]
        %v441 = vld [vmem:[%s319 + $0x20] sm:$0xff]
        %v442 = vld [vmem:[%s319 + $0x28] sm:$0xff]
        %v443 = vld [vmem:[%s319 + $0x30] sm:$0xff]
        %v444 = vld [vmem:[%s319 + $0x38] sm:$0xff]
        %v445 = vld [vmem:[%s319 + $0x40] sm:$0xff]
        %v446 = vld [vmem:[%s319 + $0x48] sm:$0xff]
        %v447 = vld [vmem:[%s319 + $0x50] sm:$0xff]
        %v448 = vld [vmem:[%s319 + $0x58] sm:$0xff]
        %v449 = vld [vmem:[%s319 + $0x60] sm:$0xff]
        %v450 = vld [vmem:[%s319 + $0x68] sm:$0xff]
        %v451 = vld [vmem:[%s319 + $0x70] sm:$0xff]
        %v452 = vld [vmem:[%s319 + $0x78] sm:$0xff]
        %v453 = vld [vmem:[%s319 + $0x80] sm:$0xff]
        %v454 = vld [vmem:[%s319 + $0x88] sm:$0xff]
        %v455 = vld [vmem:[%s319 + $0x90] sm:$0xff]
        %v456 = vld [vmem:[%s319 + $0x98] sm:$0xff]
        %v457 = vld [vmem:[%s319 + $0xa0] sm:$0xff]
        %v458 = vld [vmem:[%s319 + $0xa8] sm:$0xff]
        %v459 = vld [vmem:[%s319 + $0xb0] sm:$0xff]
        %v460 = vld [vmem:[%s319 + $0xb8] sm:$0xff]
        %v461 = vld [vmem:[%s319 + $0xc0] sm:$0xff]
        %v462 = vld [vmem:[%s319 + $0xc8] sm:$0xff]
        %v463 = vld [vmem:[%s319 + $0xd0] sm:$0xff]
        %v464 = vld [vmem:[%s319 + $0xd8] sm:$0xff]
        %v465 = vld [vmem:[%s319 + $0xe0] sm:$0xff]
        %v466 = vld [vmem:[%s319 + $0xe8] sm:$0xff]
        %v467 = vld [vmem:[%s319 + $0xf0] sm:$0xff]
        %v468 = vld [vmem:[%s319 + $0xf8] sm:$0xff]
        %469 = vmatprep.subr.mxu0 0.0
        %470 = vmatpush1.msra.mxu0 %v437
        %471 = vmatprep.subr.mxu0 0.0
        %472 = vmatpush1.msra.mxu0 %v438
        %473 = vmatprep.subr.mxu0 0.0
        %474 = vmatpush1.msra.mxu0 %v439
        %475 = vmatprep.subr.mxu0 0.0
        %476 = vmatpush1.msra.mxu0 %v440
        %477 = vmatprep.subr.mxu0 0.0
        %478 = vmatpush1.msra.mxu0 %v441
        %479 = vmatprep.subr.mxu0 0.0
        %480 = vmatpush1.msra.mxu0 %v442
        %481 = vmatprep.subr.mxu0 0.0
        %482 = vmatpush1.msra.mxu0 %v443
        %483 = vmatprep.subr.mxu0 0.0
        %484 = vmatpush1.msra.mxu0 %v444
        %485 = vmatprep.subr.mxu0 0.0
        %486 = vmatpush1.msra.mxu0 %v445
        %487 = vmatprep.subr.mxu0 0.0
        %488 = vmatpush1.msra.mxu0 %v446
        %489 = vmatprep.subr.mxu0 0.0
        %490 = vmatpush1.msra.mxu0 %v447
        %491 = vmatprep.subr.mxu0 0.0
        %492 = vmatpush1.msra.mxu0 %v448
        %493 = vmatprep.subr.mxu0 0.0
        %494 = vmatpush1.msra.mxu0 %v449
        %495 = vmatprep.subr.mxu0 0.0
        %496 = vmatpush1.msra.mxu0 %v450
        %497 = vmatprep.subr.mxu0 0.0
        %498 = vmatpush1.msra.mxu0 %v451
        %499 = vmatprep.subr.mxu0 0.0
        %500 = vmatpush1.msra.mxu0 %v452
        %501 = vmatprep.subr.mxu0 0.0
        %502 = vmatpush1.msra.mxu0 %v453
        %503 = vmatprep.subr.mxu0 0.0
        %504 = vmatpush1.msra.mxu0 %v454
        %505 = vmatprep.subr.mxu0 0.0
        %506 = vmatpush1.msra.mxu0 %v455
        %507 = vmatprep.subr.mxu0 0.0
        %508 = vmatpush1.msra.mxu0 %v456
        %509 = vmatprep.subr.mxu0 0.0
        %510 = vmatpush1.msra.mxu0 %v457
        %511 = vmatprep.subr.mxu0 0.0
        %512 = vmatpush1.msra.mxu0 %v458
        %513 = vmatprep.subr.mxu0 0.0
        %514 = vmatpush1.msra.mxu0 %v459
        %515 = vmatprep.subr.mxu0 0.0
        %516 = vmatpush1.msra.mxu0 %v460
        %517 = vmatprep.subr.mxu0 0.0
        %518 = vmatpush1.msra.mxu0 %v461
        %519 = vmatprep.subr.mxu0 0.0
        %520 = vmatpush1.msra.mxu0 %v462
        %521 = vmatprep.subr.mxu0 0.0
        %522 = vmatpush1.msra.mxu0 %v463
        %523 = vmatprep.subr.mxu0 0.0
        %524 = vmatpush1.msra.mxu0 %v464
        %525 = vmatprep.subr.mxu0 0.0
        %526 = vmatpush1.msra.mxu0 %v465
        %527 = vmatprep.subr.mxu0 0.0
        %528 = vmatpush1.msra.mxu0 %v466
        %529 = vmatprep.subr.mxu0 0.0
        %530 = vmatpush1.msra.mxu0 %v467
        %531 = vmatprep.subr.mxu0 0.0
        %532 = vmatpush1.msra.mxu0 %v468
        %533 = vmatprep.mubr.f32.mxu0 %v390
        %534 = vmatmul.mubr.f32.gmra.mrb[0].mxu0 %v389
        %v535 = vpop.f32.mrb[0].mxu0
        %v536 = vadd.f32 0.0, %v535
        %v537 = vpop.f32.mrb[0].mxu0
        %538 = vmatprep.mubr.f32.mxu0 %v392
        %539 = vmatmul.mubr.f32.gmra.mrb[0].mxu0 %v391
        %v540 = vpop.f32.mrb[0].mxu0
        %v541 = vadd.f32 0.0, %v540
        %v542 = vpop.f32.mrb[0].mxu0
        %543 = vmatprep.mubr.f32.mxu0 %v394
        %544 = vmatmul.mubr.f32.gmra.mrb[0].mxu0 %v393
        %v545 = vpop.f32.mrb[0].mxu0
        %v546 = vadd.f32 0.0, %v545
        %v547 = vpop.f32.mrb[0].mxu0
        %548 = vmatprep.mubr.f32.mxu0 %v396
        %549 = vmatmul.mubr.f32.gmra.mrb[0].mxu0 %v395
        %v550 = vpop.f32.mrb[0].mxu0
        %v551 = vadd.f32 0.0, %v550
        %v552 = vpop.f32.mrb[0].mxu0
        %553 = vmatprep.mubr.f32.mxu0 %v398
        %554 = vmatmul.mubr.f32.gmra.mrb[0].mxu0 %v397
        %v555 = vpop.f32.mrb[0].mxu0
        %v556 = vadd.f32 0.0, %v555
        %v557 = vpop.f32.mrb[0].mxu0
        %558 = vmatprep.mubr.f32.mxu0 %v400
        %559 = vmatmul.mubr.f32.gmra.mrb[0].mxu0 %v399
        %v560 = vpop.f32.mrb[0].mxu0
        %v561 = vadd.f32 0.0, %v560
        %v562 = vpop.f32.mrb[0].mxu0
        %563 = vmatprep.mubr.f32.mxu0 %v402
        %564 = vmatmul.mubr.f32.gmra.mrb[0].mxu0 %v401
        %v565 = vpop.f32.mrb[0].mxu0
        %v566 = vadd.f32 0.0, %v565
        %v567 = vpop.f32.mrb[0].mxu0
        %568 = vmatprep.mubr.f32.mxu0 %v404
        %569 = vmatmul.mubr.f32.gmra.mrb[0].mxu0 %v403
        %v570 = vpop.f32.mrb[0].mxu0
        %v571 = vadd.f32 0.0, %v570
        %v572 = vpop.f32.mrb[0].mxu0
        %573 = vmatprep.mubr.f32.mxu0 %v406
        %574 = vmatmul.mubr.f32.gmra.mrb[0].mxu0 %v405
        %v575 = vpop.f32.mrb[0].mxu0
        %v576 = vadd.f32 0.0, %v575
        %v577 = vpop.f32.mrb[0].mxu0
        %578 = vmatprep.mubr.f32.mxu0 %v408
        %579 = vmatmul.mubr.f32.gmra.mrb[0].mxu0 %v407
        %v580 = vpop.f32.mrb[0].mxu0
        %v581 = vadd.f32 0.0, %v580
        %v582 = vpop.f32.mrb[0].mxu0
        %583 = vmatprep.mubr.f32.mxu0 %v410
        %584 = vmatmul.mubr.f32.gmra.mrb[0].mxu0 %v409
        %v585 = vpop.f32.mrb[0].mxu0
        %v586 = vadd.f32 0.0, %v585
        %v587 = vpop.f32.mrb[0].mxu0
        %588 = vmatprep.mubr.f32.mxu0 %v412
        %589 = vmatmul.mubr.f32.gmra.mrb[0].mxu0 %v411
        %v590 = vpop.f32.mrb[0].mxu0
        %v591 = vadd.f32 0.0, %v590
        %v592 = vpop.f32.mrb[0].mxu0
        %593 = vmatprep.mubr.f32.mxu0 %v414
        %594 = vmatmul.mubr.f32.gmra.mrb[0].mxu0 %v413
        %v595 = vpop.f32.mrb[0].mxu0
        %v596 = vadd.f32 0.0, %v595
        %v597 = vpop.f32.mrb[0].mxu0
        %598 = vmatprep.mubr.f32.mxu0 %v416
        %599 = vmatmul.mubr.f32.gmra.mrb[0].mxu0 %v415
        %v600 = vpop.f32.mrb[0].mxu0
        %v601 = vadd.f32 0.0, %v600
        %v602 = vpop.f32.mrb[0].mxu0
        %603 = vmatprep.mubr.f32.mxu0 %v418
        %604 = vmatmul.mubr.f32.gmra.mrb[0].mxu0 %v417
        %v605 = vpop.f32.mrb[0].mxu0
        %v606 = vadd.f32 0.0, %v605
        %v607 = vpop.f32.mrb[0].mxu0
        %608 = vmatprep.mubr.f32.mxu0 %v420
        %609 = vmatmul.mubr.f32.gmra.mrb[0].mxu0 %v419
        %v610 = vpop.f32.mrb[0].mxu0
        %v611 = vadd.f32 0.0, %v610
        %v612 = vpop.f32.mrb[0].mxu0
        %613 = vdwg.mxu0
        %v614 = vadd.f32 %v421, %v536
        %v615 = vadd.f32 %v422, %v541
        %v616 = vadd.f32 %v423, %v546
        %v617 = vadd.f32 %v424, %v551
        %v618 = vadd.f32 %v425, %v556
        %v619 = vadd.f32 %v426, %v561
        %v620 = vadd.f32 %v427, %v566
        %v621 = vadd.f32 %v428, %v571
        %v622 = vadd.f32 %v429, %v576
        %v623 = vadd.f32 %v430, %v581
        %v624 = vadd.f32 %v431, %v586
        %v625 = vadd.f32 %v432, %v591
        %v626 = vadd.f32 %v433, %v596
        %v627 = vadd.f32 %v434, %v601
        %v628 = vadd.f32 %v435, %v606
        %v629 = vadd.f32 %v436, %v611
        %vm630 = vcmask 138240
        %631 = vst.msk [vmem:[#allocation2] sm:$0xff] %vm630, %v614
        %632 = vst.msk [vmem:[#allocation2 + $0x8] sm:$0xff] %vm630, %v615
        %633 = vst.msk [vmem:[#allocation2 + $0x10] sm:$0xff] %vm630, %v616
        %634 = vst.msk [vmem:[#allocation2 + $0x18] sm:$0xff] %vm630, %v617
        %635 = vst.msk [vmem:[#allocation2 + $0x20] sm:$0xff] %vm630, %v618
        %636 = vst.msk [vmem:[#allocation2 + $0x28] sm:$0xff] %vm630, %v619
        %637 = vst.msk [vmem:[#allocation2 + $0x30] sm:$0xff] %vm630, %v620
        %638 = vst.msk [vmem:[#allocation2 + $0x38] sm:$0xff] %vm630, %v621
        %639 = vst.msk [vmem:[#allocation2 + $0x40] sm:$0xff] %vm630, %v622
        %640 = vst.msk [vmem:[#allocation2 + $0x48] sm:$0xff] %vm630, %v623
        %641 = vst.msk [vmem:[#allocation2 + $0x50] sm:$0xff] %vm630, %v624
        %642 = vst.msk [vmem:[#allocation2 + $0x58] sm:$0xff] %vm630, %v625
        %643 = vst.msk [vmem:[#allocation2 + $0x60] sm:$0xff] %vm630, %v626
        %644 = vst.msk [vmem:[#allocation2 + $0x68] sm:$0xff] %vm630, %v627
        %645 = vst.msk [vmem:[#allocation2 + $0x70] sm:$0xff] %vm630, %v628
        %646 = vst.msk [vmem:[#allocation2 + $0x78] sm:$0xff] %vm630, %v629
        // Predicated region
        $region49: #{tpu_custom_call.1} parent=43 // pred_check
          %p647 = pneg %p328
        $region50: #{tpu_custom_call.1} parent=43 // pred_check_branch
          %649 = sbr.rel (%p647) target = $region52
        $region51: #{tpu_custom_call.1} parent=43 // pred_region
          %v650 = vld [vmem:[#allocation2] sm:$0xff]
          %v651 = vld [vmem:[#allocation2 + $0x8] sm:$0xff]
          %v652 = vld [vmem:[#allocation2 + $0x10] sm:$0xff]
          %v653 = vld [vmem:[#allocation2 + $0x18] sm:$0xff]
          %v654 = vld [vmem:[#allocation2 + $0x20] sm:$0xff]
          %v655 = vld [vmem:[#allocation2 + $0x28] sm:$0xff]
          %v656 = vld [vmem:[#allocation2 + $0x30] sm:$0xff]
          %v657 = vld [vmem:[#allocation2 + $0x38] sm:$0xff]
          %v658 = vld [vmem:[#allocation2 + $0x40] sm:$0xff]
          %v659 = vld [vmem:[#allocation2 + $0x48] sm:$0xff]
          %v660 = vld [vmem:[#allocation2 + $0x50] sm:$0xff]
          %v661 = vld [vmem:[#allocation2 + $0x58] sm:$0xff]
          %v662 = vld [vmem:[#allocation2 + $0x60] sm:$0xff]
          %v663 = vld [vmem:[#allocation2 + $0x68] sm:$0xff]
          %v664 = vld [vmem:[#allocation2 + $0x70] sm:$0xff]
          %v665 = vld [vmem:[#allocation2 + $0x78] sm:$0xff]
          %v666 = vmax.f32 %v650, 1.0
          %v667 = vmax.f32 %v651, 1.0
          %v668 = vmax.f32 %v652, 1.0
          %v669 = vmax.f32 %v653, 1.0
          %v670 = vmax.f32 %v654, 1.0
          %v671 = vmax.f32 %v655, 1.0
          %v672 = vmax.f32 %v656, 1.0
          %v673 = vmax.f32 %v657, 1.0
          %v674 = vmax.f32 %v658, 1.0
          %v675 = vmax.f32 %v659, 1.0
          %v676 = vmax.f32 %v660, 1.0
          %v677 = vmax.f32 %v661, 1.0
          %v678 = vmax.f32 %v662, 1.0
          %v679 = vmax.f32 %v663, 1.0
          %v680 = vmax.f32 %v664, 1.0
          %v681 = vmax.f32 %v665, 1.0
          %v682 = vrcp.pop %v666
          %v683 = vrcp.pop %v667
          %v684 = vrcp.pop %v668
          %v685 = vrcp.pop %v669
          %v686 = vrcp.pop %v670
          %v687 = vrcp.pop %v671
          %v688 = vrcp.pop %v672
          %v689 = vrcp.pop %v673
          %v690 = vrcp.pop %v674
          %v691 = vrcp.pop %v675
          %v692 = vrcp.pop %v676
          %v693 = vrcp.pop %v677
          %v694 = vrcp.pop %v678
          %v695 = vrcp.pop %v679
          %v696 = vrcp.pop %v680
          %v697 = vrcp.pop %v681
          %699 = vset.pattern.permute.xlu0 16
          %700 = vperm.xlu0 %699, %v682
          %v701 = vpop.permute.xlu0 %700
          %704 = vset.pattern.permute.xlu0 16
          %705 = vperm.xlu0 %704, %v683
          %v706 = vpop.permute.xlu0 %705
          %709 = vset.pattern.permute.xlu0 16
          %710 = vperm.xlu0 %709, %v684
          %v711 = vpop.permute.xlu0 %710
          %714 = vset.pattern.permute.xlu0 16
          %715 = vperm.xlu0 %714, %v685
          %v716 = vpop.permute.xlu0 %715
          %719 = vset.pattern.permute.xlu0 16
          %720 = vperm.xlu0 %719, %v686
          %v721 = vpop.permute.xlu0 %720
          %724 = vset.pattern.permute.xlu0 16
          %725 = vperm.xlu0 %724, %v687
          %v726 = vpop.permute.xlu0 %725
          %729 = vset.pattern.permute.xlu0 16
          %730 = vperm.xlu0 %729, %v688
          %v731 = vpop.permute.xlu0 %730
          %734 = vset.pattern.permute.xlu0 16
          %735 = vperm.xlu0 %734, %v689
          %v736 = vpop.permute.xlu0 %735
          %739 = vset.pattern.permute.xlu0 16
          %740 = vperm.xlu0 %739, %v690
          %v741 = vpop.permute.xlu0 %740
          %744 = vset.pattern.permute.xlu0 16
          %745 = vperm.xlu0 %744, %v691
          %v746 = vpop.permute.xlu0 %745
          %749 = vset.pattern.permute.xlu0 16
          %750 = vperm.xlu0 %749, %v692
          %v751 = vpop.permute.xlu0 %750
          %754 = vset.pattern.permute.xlu0 16
          %755 = vperm.xlu0 %754, %v693
          %v756 = vpop.permute.xlu0 %755
          %759 = vset.pattern.permute.xlu0 16
          %760 = vperm.xlu0 %759, %v694
          %v761 = vpop.permute.xlu0 %760
          %764 = vset.pattern.permute.xlu0 16
          %765 = vperm.xlu0 %764, %v695
          %v766 = vpop.permute.xlu0 %765
          %769 = vset.pattern.permute.xlu0 16
          %770 = vperm.xlu0 %769, %v696
          %v771 = vpop.permute.xlu0 %770
          %774 = vset.pattern.permute.xlu0 16
          %775 = vperm.xlu0 %774, %v697
          %v776 = vpop.permute.xlu0 %775
          %v778 = vmul.f32 %v650, %v701
          %v779 = vmul.f32 %v651, %v706
          %v780 = vmul.f32 %v652, %v711
          %v781 = vmul.f32 %v653, %v716
          %v782 = vmul.f32 %v654, %v721
          %v783 = vmul.f32 %v655, %v726
          %v784 = vmul.f32 %v656, %v731
          %v785 = vmul.f32 %v657, %v736
          %v786 = vmul.f32 %v658, %v741
          %v787 = vmul.f32 %v659, %v746
          %v788 = vmul.f32 %v660, %v751
          %v789 = vmul.f32 %v661, %v756
          %v790 = vmul.f32 %v662, %v761
          %v791 = vmul.f32 %v663, %v766
          %v792 = vmul.f32 %v664, %v771
          %v793 = vmul.f32 %v665, %v776
          %v794 = vld [vmem:[%s325] sm:$0xff]
          %v795 = vld [vmem:[%s325 + $0x8] sm:$0xff]
          %v796 = vld [vmem:[%s325 + $0x10] sm:$0xff]
          %v797 = vld [vmem:[%s325 + $0x18] sm:$0xff]
          %v798 = vld [vmem:[%s325 + $0x20] sm:$0xff]
          %v799 = vld [vmem:[%s325 + $0x28] sm:$0xff]
          %v800 = vld [vmem:[%s325 + $0x30] sm:$0xff]
          %v801 = vld [vmem:[%s325 + $0x38] sm:$0xff]
          %v802 = vld [vmem:[%s325 + $0x40] sm:$0xff]
          %v803 = vld [vmem:[%s325 + $0x48] sm:$0xff]
          %v804 = vld [vmem:[%s325 + $0x50] sm:$0xff]
          %v805 = vld [vmem:[%s325 + $0x58] sm:$0xff]
          %v806 = vld [vmem:[%s325 + $0x60] sm:$0xff]
          %v807 = vld [vmem:[%s325 + $0x68] sm:$0xff]
          %v808 = vld [vmem:[%s325 + $0x70] sm:$0xff]
          %v809 = vld [vmem:[%s325 + $0x78] sm:$0xff]
          %v810 = vld [vmem:[%s3] sm:$0xff]
          %v811 = vld [vmem:[%s3 + $0x8] sm:$0xff]
          %v812 = vld [vmem:[%s4] sm:$0xff]
          %v813 = vld [vmem:[%s4 + $0x8] sm:$0xff]
          %vm814 = vcmask 130048
          %v816 = vsel %vm814, %v778, 0
          %v819 = vsel %vm814, %v779, 0
          %v822 = vsel %vm814, %v780, 0
          %v825 = vsel %vm814, %v781, 0
          %v828 = vsel %vm814, %v782, 0
          %v831 = vsel %vm814, %v783, 0
          %v834 = vsel %vm814, %v784, 0
          %v837 = vsel %vm814, %v785, 0
          %v840 = vsel %vm814, %v786, 0
          %v843 = vsel %vm814, %v787, 0
          %v846 = vsel %vm814, %v788, 0
          %v849 = vsel %vm814, %v789, 0
          %v852 = vsel %vm814, %v790, 0
          %v855 = vsel %vm814, %v791, 0
          %v858 = vsel %vm814, %v792, 0
          %v861 = vsel %vm814, %v793, 0
          %863 = vmatprep.subr.mxu0 0.0
          %864 = vmatpush1.msra.mxu0 %v812
          %865 = vmatprep.subr.mxu0 0.0
          %866 = vmatpush1.msra.mxu0 %v813
          %867 = vmatprep.subr.mxu0 0.0
          %868 = vmatpush1.msra.mxu0 0.0
          %869 = vmatprep.subr.mxu0 0.0
          %870 = vmatpush1.msra.mxu0 0.0
          %871 = vmatprep.subr.mxu0 0.0
          %872 = vmatpush1.msra.mxu0 0.0
          %873 = vmatprep.subr.mxu0 0.0
          %874 = vmatpush1.msra.mxu0 0.0
          %875 = vmatprep.subr.mxu0 0.0
          %876 = vmatpush1.msra.mxu0 0.0
          %877 = vmatprep.subr.mxu0 0.0
          %878 = vmatpush1.msra.mxu0 0.0
          %879 = vmatprep.subr.mxu0 0.0
          %880 = vmatpush1.msra.mxu0 0.0
          %881 = vmatprep.subr.mxu0 0.0
          %882 = vmatpush1.msra.mxu0 0.0
          %883 = vmatprep.subr.mxu0 0.0
          %884 = vmatpush1.msra.mxu0 0.0
          %885 = vmatprep.subr.mxu0 0.0
          %886 = vmatpush1.msra.mxu0 0.0
          %887 = vmatprep.subr.mxu0 0.0
          %888 = vmatpush1.msra.mxu0 0.0
          %889 = vmatprep.subr.mxu0 0.0
          %890 = vmatpush1.msra.mxu0 0.0
          %891 = vmatprep.subr.mxu0 0.0
          %892 = vmatpush1.msra.mxu0 0.0
          %893 = vmatprep.subr.mxu0 0.0
          %894 = vmatpush1.msra.mxu0 0.0
          %895 = vmatprep.subr.mxu0 0.0
          %896 = vmatpush1.msra.mxu0 0.0
          %897 = vmatprep.subr.mxu0 0.0
          %898 = vmatpush1.msra.mxu0 0.0
          %899 = vmatprep.subr.mxu0 0.0
          %900 = vmatpush1.msra.mxu0 0.0
          %901 = vmatprep.subr.mxu0 0.0
          %902 = vmatpush1.msra.mxu0 0.0
          %903 = vmatprep.subr.mxu0 0.0
          %904 = vmatpush1.msra.mxu0 0.0
          %905 = vmatprep.subr.mxu0 0.0
          %906 = vmatpush1.msra.mxu0 0.0
          %907 = vmatprep.subr.mxu0 0.0
          %908 = vmatpush1.msra.mxu0 0.0
          %909 = vmatprep.subr.mxu0 0.0
          %910 = vmatpush1.msra.mxu0 0.0
          %911 = vmatprep.subr.mxu0 0.0
          %912 = vmatpush1.msra.mxu0 0.0
          %913 = vmatprep.subr.mxu0 0.0
          %914 = vmatpush1.msra.mxu0 0.0
          %915 = vmatprep.subr.mxu0 0.0
          %916 = vmatpush1.msra.mxu0 0.0
          %917 = vmatprep.subr.mxu0 0.0
          %918 = vmatpush1.msra.mxu0 0.0
          %919 = vmatprep.subr.mxu0 0.0
          %920 = vmatpush1.msra.mxu0 0.0
          %921 = vmatprep.subr.mxu0 0.0
          %922 = vmatpush1.msra.mxu0 0.0
          %923 = vmatprep.subr.mxu0 0.0
          %924 = vmatpush1.msra.mxu0 0.0
          %925 = vmatprep.subr.mxu0 0.0
          %926 = vmatpush1.msra.mxu0 0.0
          %927 = vmatprep.mubr.f32.mxu0 0.0
          %928 = vmatmul.mubr.f32.gmra.mrb[0].mxu0 %v816
          %v929 = vpop.f32.mrb[0].mxu0
          %v930 = vadd.f32 0.0, %v929
          %v931 = vpop.f32.mrb[0].mxu0
          %932 = vmatprep.mubr.f32.mxu0 0.0
          %933 = vmatmul.mubr.f32.gmra.mrb[0].mxu0 %v819
          %v934 = vpop.f32.mrb[0].mxu0
          %v935 = vadd.f32 0.0, %v934
          %v936 = vpop.f32.mrb[0].mxu0
          %937 = vmatprep.mubr.f32.mxu0 0.0
          %938 = vmatmul.mubr.f32.gmra.mrb[0].mxu0 %v822
          %v939 = vpop.f32.mrb[0].mxu0
          %v940 = vadd.f32 0.0, %v939
          %v941 = vpop.f32.mrb[0].mxu0
          %942 = vmatprep.mubr.f32.mxu0 0.0
          %943 = vmatmul.mubr.f32.gmra.mrb[0].mxu0 %v825
          %v944 = vpop.f32.mrb[0].mxu0
          %v945 = vadd.f32 0.0, %v944
          %v946 = vpop.f32.mrb[0].mxu0
          %947 = vmatprep.mubr.f32.mxu0 0.0
          %948 = vmatmul.mubr.f32.gmra.mrb[0].mxu0 %v828
          %v949 = vpop.f32.mrb[0].mxu0
          %v950 = vadd.f32 0.0, %v949
          %v951 = vpop.f32.mrb[0].mxu0
          %952 = vmatprep.mubr.f32.mxu0 0.0
          %953 = vmatmul.mubr.f32.gmra.mrb[0].mxu0 %v831
          %v954 = vpop.f32.mrb[0].mxu0
          %v955 = vadd.f32 0.0, %v954
          %v956 = vpop.f32.mrb[0].mxu0
          %957 = vmatprep.mubr.f32.mxu0 0.0
          %958 = vmatmul.mubr.f32.gmra.mrb[0].mxu0 %v834
          %v959 = vpop.f32.mrb[0].mxu0
          %v960 = vadd.f32 0.0, %v959
          %v961 = vpop.f32.mrb[0].mxu0
          %962 = vmatprep.mubr.f32.mxu0 0.0
          %963 = vmatmul.mubr.f32.gmra.mrb[0].mxu0 %v837
          %v964 = vpop.f32.mrb[0].mxu0
          %v965 = vadd.f32 0.0, %v964
          %v966 = vpop.f32.mrb[0].mxu0
          %967 = vmatprep.mubr.f32.mxu0 0.0
          %968 = vmatmul.mubr.f32.gmra.mrb[0].mxu0 %v840
          %v969 = vpop.f32.mrb[0].mxu0
          %v970 = vadd.f32 0.0, %v969
          %v971 = vpop.f32.mrb[0].mxu0
          %972 = vmatprep.mubr.f32.mxu0 0.0
          %973 = vmatmul.mubr.f32.gmra.mrb[0].mxu0 %v843
          %v974 = vpop.f32.mrb[0].mxu0
          %v975 = vadd.f32 0.0, %v974
          %v976 = vpop.f32.mrb[0].mxu0
          %977 = vmatprep.mubr.f32.mxu0 0.0
          %978 = vmatmul.mubr.f32.gmra.mrb[0].mxu0 %v846
          %v979 = vpop.f32.mrb[0].mxu0
          %v980 = vadd.f32 0.0, %v979
          %v981 = vpop.f32.mrb[0].mxu0
          %982 = vmatprep.mubr.f32.mxu0 0.0
          %983 = vmatmul.mubr.f32.gmra.mrb[0].mxu0 %v849
          %v984 = vpop.f32.mrb[0].mxu0
          %v985 = vadd.f32 0.0, %v984
          %v986 = vpop.f32.mrb[0].mxu0
          %987 = vmatprep.mubr.f32.mxu0 0.0
          %988 = vmatmul.mubr.f32.gmra.mrb[0].mxu0 %v852
          %v989 = vpop.f32.mrb[0].mxu0
          %v990 = vadd.f32 0.0, %v989
          %v991 = vpop.f32.mrb[0].mxu0
          %992 = vmatprep.mubr.f32.mxu0 0.0
          %993 = vmatmul.mubr.f32.gmra.mrb[0].mxu0 %v855
          %v994 = vpop.f32.mrb[0].mxu0
          %v995 = vadd.f32 0.0, %v994
          %v996 = vpop.f32.mrb[0].mxu0
          %997 = vmatprep.mubr.f32.mxu0 0.0
          %998 = vmatmul.mubr.f32.gmra.mrb[0].mxu0 %v858
          %v999 = vpop.f32.mrb[0].mxu0
          %v1000 = vadd.f32 0.0, %v999
          %v1001 = vpop.f32.mrb[0].mxu0
          %1002 = vmatprep.mubr.f32.mxu0 0.0
          %1003 = vmatmul.mubr.f32.gmra.mrb[0].mxu0 %v861
          %v1004 = vpop.f32.mrb[0].mxu0
          %v1005 = vadd.f32 0.0, %v1004
          %v1006 = vpop.f32.mrb[0].mxu0
          %1007 = vdwg.mxu0
          %v1009 = vsel %vm814, %v794, 0
          %v1012 = vsel %vm814, %v795, 0
          %v1015 = vsel %vm814, %v796, 0
          %v1018 = vsel %vm814, %v797, 0
          %v1021 = vsel %vm814, %v798, 0
          %v1024 = vsel %vm814, %v799, 0
          %v1027 = vsel %vm814, %v800, 0
          %v1030 = vsel %vm814, %v801, 0
          %v1033 = vsel %vm814, %v802, 0
          %v1036 = vsel %vm814, %v803, 0
          %v1039 = vsel %vm814, %v804, 0
          %v1042 = vsel %vm814, %v805, 0
          %v1045 = vsel %vm814, %v806, 0
          %v1048 = vsel %vm814, %v807, 0
          %v1051 = vsel %vm814, %v808, 0
          %v1054 = vsel %vm814, %v809, 0
          %1056 = vmatprep.subr.mxu0 0.0
          %1057 = vmatpush1.msra.mxu0 %v810
          %1058 = vmatprep.subr.mxu0 0.0
          %1059 = vmatpush1.msra.mxu0 %v811
          %1060 = vmatprep.subr.mxu0 0.0
          %1061 = vmatpush1.msra.mxu0 0.0
          %1062 = vmatprep.subr.mxu0 0.0
          %1063 = vmatpush1.msra.mxu0 0.0
          %1064 = vmatprep.subr.mxu0 0.0
          %1065 = vmatpush1.msra.mxu0 0.0
          %1066 = vmatprep.subr.mxu0 0.0
          %1067 = vmatpush1.msra.mxu0 0.0
          %1068 = vmatprep.subr.mxu0 0.0
          %1069 = vmatpush1.msra.mxu0 0.0
          %1070 = vmatprep.subr.mxu0 0.0
          %1071 = vmatpush1.msra.mxu0 0.0
          %1072 = vmatprep.subr.mxu0 0.0
          %1073 = vmatpush1.msra.mxu0 0.0
          %1074 = vmatprep.subr.mxu0 0.0
          %1075 = vmatpush1.msra.mxu0 0.0
          %1076 = vmatprep.subr.mxu0 0.0
          %1077 = vmatpush1.msra.mxu0 0.0
          %1078 = vmatprep.subr.mxu0 0.0
          %1079 = vmatpush1.msra.mxu0 0.0
          %1080 = vmatprep.subr.mxu0 0.0
          %1081 = vmatpush1.msra.mxu0 0.0
          %1082 = vmatprep.subr.mxu0 0.0
          %1083 = vmatpush1.msra.mxu0 0.0
          %1084 = vmatprep.subr.mxu0 0.0
          %1085 = vmatpush1.msra.mxu0 0.0
          %1086 = vmatprep.subr.mxu0 0.0
          %1087 = vmatpush1.msra.mxu0 0.0
          %1088 = vmatprep.subr.mxu0 0.0
          %1089 = vmatpush1.msra.mxu0 0.0
          %1090 = vmatprep.subr.mxu0 0.0
          %1091 = vmatpush1.msra.mxu0 0.0
          %1092 = vmatprep.subr.mxu0 0.0
          %1093 = vmatpush1.msra.mxu0 0.0
          %1094 = vmatprep.subr.mxu0 0.0
          %1095 = vmatpush1.msra.mxu0 0.0
          %1096 = vmatprep.subr.mxu0 0.0
          %1097 = vmatpush1.msra.mxu0 0.0
          %1098 = vmatprep.subr.mxu0 0.0
          %1099 = vmatpush1.msra.mxu0 0.0
          %1100 = vmatprep.subr.mxu0 0.0
          %1101 = vmatpush1.msra.mxu0 0.0
          %1102 = vmatprep.subr.mxu0 0.0
          %1103 = vmatpush1.msra.mxu0 0.0
          %1104 = vmatprep.subr.mxu0 0.0
          %1105 = vmatpush1.msra.mxu0 0.0
          %1106 = vmatprep.subr.mxu0 0.0
          %1107 = vmatpush1.msra.mxu0 0.0
          %1108 = vmatprep.subr.mxu0 0.0
          %1109 = vmatpush1.msra.mxu0 0.0
          %1110 = vmatprep.subr.mxu0 0.0
          %1111 = vmatpush1.msra.mxu0 0.0
          %1112 = vmatprep.subr.mxu0 0.0
          %1113 = vmatpush1.msra.mxu0 0.0
          %1114 = vmatprep.subr.mxu0 0.0
          %1115 = vmatpush1.msra.mxu0 0.0
          %1116 = vmatprep.subr.mxu0 0.0
          %1117 = vmatpush1.msra.mxu0 0.0
          %1118 = vmatprep.subr.mxu0 0.0
          %1119 = vmatpush1.msra.mxu0 0.0
          %1120 = vmatprep.mubr.f32.mxu0 0.0
          %1121 = vmatmul.mubr.f32.gmra.mrb[0].mxu0 %v1009
          %v1122 = vpop.f32.mrb[0].mxu0
          %v1123 = vadd.f32 %v930, %v1122
          %v1124 = vpop.f32.mrb[0].mxu0
          %1125 = vmatprep.mubr.f32.mxu0 0.0
          %1126 = vmatmul.mubr.f32.gmra.mrb[0].mxu0 %v1012
          %v1127 = vpop.f32.mrb[0].mxu0
          %v1128 = vadd.f32 %v935, %v1127
          %v1129 = vpop.f32.mrb[0].mxu0
          %1130 = vmatprep.mubr.f32.mxu0 0.0
          %1131 = vmatmul.mubr.f32.gmra.mrb[0].mxu0 %v1015
          %v1132 = vpop.f32.mrb[0].mxu0
          %v1133 = vadd.f32 %v940, %v1132
          %v1134 = vpop.f32.mrb[0].mxu0
          %1135 = vmatprep.mubr.f32.mxu0 0.0
          %1136 = vmatmul.mubr.f32.gmra.mrb[0].mxu0 %v1018
          %v1137 = vpop.f32.mrb[0].mxu0
          %v1138 = vadd.f32 %v945, %v1137
          %v1139 = vpop.f32.mrb[0].mxu0
          %1140 = vmatprep.mubr.f32.mxu0 0.0
          %1141 = vmatmul.mubr.f32.gmra.mrb[0].mxu0 %v1021
          %v1142 = vpop.f32.mrb[0].mxu0
          %v1143 = vadd.f32 %v950, %v1142
          %v1144 = vpop.f32.mrb[0].mxu0
          %1145 = vmatprep.mubr.f32.mxu0 0.0
          %1146 = vmatmul.mubr.f32.gmra.mrb[0].mxu0 %v1024
          %v1147 = vpop.f32.mrb[0].mxu0
          %v1148 = vadd.f32 %v955, %v1147
          %v1149 = vpop.f32.mrb[0].mxu0
          %1150 = vmatprep.mubr.f32.mxu0 0.0
          %1151 = vmatmul.mubr.f32.gmra.mrb[0].mxu0 %v1027
          %v1152 = vpop.f32.mrb[0].mxu0
          %v1153 = vadd.f32 %v960, %v1152
          %v1154 = vpop.f32.mrb[0].mxu0
          %1155 = vmatprep.mubr.f32.mxu0 0.0
          %1156 = vmatmul.mubr.f32.gmra.mrb[0].mxu0 %v1030
          %v1157 = vpop.f32.mrb[0].mxu0
          %v1158 = vadd.f32 %v965, %v1157
          %v1159 = vpop.f32.mrb[0].mxu0
          %1160 = vmatprep.mubr.f32.mxu0 0.0
          %1161 = vmatmul.mubr.f32.gmra.mrb[0].mxu0 %v1033
          %v1162 = vpop.f32.mrb[0].mxu0
          %v1163 = vadd.f32 %v970, %v1162
          %v1164 = vpop.f32.mrb[0].mxu0
          %1165 = vmatprep.mubr.f32.mxu0 0.0
          %1166 = vmatmul.mubr.f32.gmra.mrb[0].mxu0 %v1036
          %v1167 = vpop.f32.mrb[0].mxu0
          %v1168 = vadd.f32 %v975, %v1167
          %v1169 = vpop.f32.mrb[0].mxu0
          %1170 = vmatprep.mubr.f32.mxu0 0.0
          %1171 = vmatmul.mubr.f32.gmra.mrb[0].mxu0 %v1039
          %v1172 = vpop.f32.mrb[0].mxu0
          %v1173 = vadd.f32 %v980, %v1172
          %v1174 = vpop.f32.mrb[0].mxu0
          %1175 = vmatprep.mubr.f32.mxu0 0.0
          %1176 = vmatmul.mubr.f32.gmra.mrb[0].mxu0 %v1042
          %v1177 = vpop.f32.mrb[0].mxu0
          %v1178 = vadd.f32 %v985, %v1177
          %v1179 = vpop.f32.mrb[0].mxu0
          %1180 = vmatprep.mubr.f32.mxu0 0.0
          %1181 = vmatmul.mubr.f32.gmra.mrb[0].mxu0 %v1045
          %v1182 = vpop.f32.mrb[0].mxu0
          %v1183 = vadd.f32 %v990, %v1182
          %v1184 = vpop.f32.mrb[0].mxu0
          %1185 = vmatprep.mubr.f32.mxu0 0.0
          %1186 = vmatmul.mubr.f32.gmra.mrb[0].mxu0 %v1048
          %v1187 = vpop.f32.mrb[0].mxu0
          %v1188 = vadd.f32 %v995, %v1187
          %v1189 = vpop.f32.mrb[0].mxu0
          %1190 = vmatprep.mubr.f32.mxu0 0.0
          %1191 = vmatmul.mubr.f32.gmra.mrb[0].mxu0 %v1051
          %v1192 = vpop.f32.mrb[0].mxu0
          %v1193 = vadd.f32 %v1000, %v1192
          %v1194 = vpop.f32.mrb[0].mxu0
          %1195 = vmatprep.mubr.f32.mxu0 0.0
          %1196 = vmatmul.mubr.f32.gmra.mrb[0].mxu0 %v1054
          %v1197 = vpop.f32.mrb[0].mxu0
          %v1198 = vadd.f32 %v1005, %v1197
          %v1199 = vpop.f32.mrb[0].mxu0
          %1200 = vdwg.mxu0
          %v1201 = vld [vmem:[%s5] sm:$0x1]
          %v1203 = vlaneseq
          %v1204 = vshrl.u32 %v1203, 7
          %v1205 = vsub.s32 0, %v1204
          %v1206 = vrot.slane %v1201, %v1205
          %v1208 = vadd.f32 %v1123, %v1206
          %v1209 = vadd.f32 %v1128, %v1206
          %v1210 = vadd.f32 %v1133, %v1206
          %v1211 = vadd.f32 %v1138, %v1206
          %v1212 = vadd.f32 %v1143, %v1206
          %v1213 = vadd.f32 %v1148, %v1206
          %v1214 = vadd.f32 %v1153, %v1206
          %v1215 = vadd.f32 %v1158, %v1206
          %v1216 = vadd.f32 %v1163, %v1206
          %v1217 = vadd.f32 %v1168, %v1206
          %v1218 = vadd.f32 %v1173, %v1206
          %v1219 = vadd.f32 %v1178, %v1206
          %v1220 = vadd.f32 %v1183, %v1206
          %v1221 = vadd.f32 %v1188, %v1206
          %v1222 = vadd.f32 %v1193, %v1206
          %v1223 = vadd.f32 %v1198, %v1206
          %1224 = vst [vmem:[%s302] sm:$0xff] %v1208
          %1225 = vst [vmem:[%s302 + $0x8] sm:$0xff] %v1209
          %1226 = vst [vmem:[%s302 + $0x10] sm:$0xff] %v1210
          %1227 = vst [vmem:[%s302 + $0x18] sm:$0xff] %v1211
          %1228 = vst [vmem:[%s302 + $0x20] sm:$0xff] %v1212
          %1229 = vst [vmem:[%s302 + $0x28] sm:$0xff] %v1213
          %1230 = vst [vmem:[%s302 + $0x30] sm:$0xff] %v1214
          %1231 = vst [vmem:[%s302 + $0x38] sm:$0xff] %v1215
          %1232 = vst [vmem:[%s302 + $0x40] sm:$0xff] %v1216
          %1233 = vst [vmem:[%s302 + $0x48] sm:$0xff] %v1217
          %1234 = vst [vmem:[%s302 + $0x50] sm:$0xff] %v1218
          %1235 = vst [vmem:[%s302 + $0x58] sm:$0xff] %v1219
          %1236 = vst [vmem:[%s302 + $0x60] sm:$0xff] %v1220
          %1237 = vst [vmem:[%s302 + $0x68] sm:$0xff] %v1221
          %1238 = vst [vmem:[%s302 + $0x70] sm:$0xff] %v1222
          %1239 = vst [vmem:[%s302 + $0x78] sm:$0xff] %v1223
        $region52: #{tpu_custom_call.1} parent=43 // pred_fallthru
          _
        %s1240 = sand.u32 %s183, 1
        %s1241 = scalar_lea.sflag [#allocation4], %s1240
        %s1242 = sand.u32 %s183, 1
        %s1243 = smul.addr %s1242, 128
        %s1244 = scalar_lea.vmem [#allocation3], %s1243
        // Predicated region
        $region53: #{tpu_custom_call.1} parent=43 // pred_check
          %p1245 = pneg %p193
        $region54: #{tpu_custom_call.1} parent=43 // pred_check_branch
          %1247 = sbr.rel (%p1245) target = $region56
        $region55: #{tpu_custom_call.1} parent=43 // pred_region
          %s1248 = smul.u32 16, %s24
          %s1250 = ssub.s32 2048, 2048
          %1251 = vsyncadd %s1241, %s1250
          %s1252 = smul.addr %s1248, 128
          %s1253 = scalar_lea.hbm %s6, %s1252
          %s1254 = sshll.u32 %s1244, 4
          %s1255 = int_to_ptr.vmem [resolvable:$true] %s1254
          %1260 = dma.vmem_to_hbm [thread:$0]  %s1255, 2048, %s1253, %s1241, 128, 128, 8
        $region56: #{tpu_custom_call.1} parent=43 // pred_fallthru
          _
      $region44: #{tpu_custom_call.1} parent=5 // pred_fallthru
        _
      %p1261 = scmp.le.s32.totalorder 2, %s15
      // Predicated region
      $region57: #{tpu_custom_call.1} parent=5 // pred_check
        %p1262 = pneg %p1261
      $region58: #{tpu_custom_call.1} parent=5 // pred_check_branch
        %1264 = sbr.rel (%p1262) target = $region60
      $region59: #{tpu_custom_call.1} parent=5 // pred_region
        %s1265 = ssub.s32 %s15, 2
        // Predicated region
        $region61: #{tpu_custom_call.1} parent=59 // pred_check
          %p1266 = pneg %p199
        $region62: #{tpu_custom_call.1} parent=59 // pred_check_branch
          %1268 = sbr.rel (%p1266) target = $region64
        $region63: #{tpu_custom_call.1} parent=59 // pred_region
          %s1269 = sand.u32 %s184, 1
          %s1270 = scalar_lea.sflag [#allocation4], %s1269
          %s1271 = sand.u32 %s184, 1
          %s1272 = smul.addr %s1271, 128
          %s1273 = scalar_lea.vmem [#allocation3], %s1272
          %1274 = dma.done %s1270, 2048
        $region64: #{tpu_custom_call.1} parent=59 // pred_fallthru
          _
      $region60: #{tpu_custom_call.1} parent=5 // pred_fallthru
        _
    $region6: #{tpu_custom_call.1} parent=1 // loop_footer
      %s19 = sadd.s32 1, %s15
    $region7: #{tpu_custom_call.1} parent=1 // loop_footer_branch
      %14 = sbr.rel target = $region3
    $region8: #{tpu_custom_call.1} parent=1 // loop_exit
      _
    %1275 = vsyncpa [#allocation4], 1
    %s1276 = scalar_lea.sflag [#allocation4], 1
    %1277 = vsyncpa %s1276, 1

</llo_original>
